<compile_context>
chip_gen: v6e
topology: v6e:2x2x1
jax: 0.10.0
libtpu: 0.0.40
codegen_flags: <defaults>
</compile_context>

<pallas_src>
import jax
import jax.numpy as jnp
from jax.experimental import pallas as pl
from jax.experimental.pallas import tpu as pltpu


_TARGET_BLOCK_BYTES = 4 * 1024 * 1024   # 4 MiB block -> ~16 MiB dbl-buffered in+out
_VMEM_LIMIT_BYTES = 32 * 1024 * 1024    # explicit scoped-VMEM limit, portable on v5e/v6e/v7x


def _sigmoid_kernel(x_ref, o_ref):
    # sigmoid(x) = 1 / (1 + exp(-x)); exp and exact reciprocal both go to the
    # EUP slot, fully hidden under the streaming DMA.
    x32 = x_ref[...].astype(jnp.float32)
    denom = 1.0 + jnp.exp(-x32)
    o_ref[...] = pl.reciprocal(denom, approx=False).astype(o_ref.dtype)


def _round_up(n, m):
    return ((n + m - 1) // m) * m


def _compiler_params():
    return pltpu.CompilerParams(
        dimension_semantics=("parallel",),
        vmem_limit_bytes=_VMEM_LIMIT_BYTES,
    )


def _sigmoid_rows(x2d, out_dtype):
    """Kernel over a lane-dense (rows, width) slab, tiled along rows."""
    rows, width = x2d.shape
    itemsize = jnp.dtype(x2d.dtype).itemsize
    # dtype-correct sublane multiple: 8 for 4-byte, 16 for 2-byte, 32 for 1-byte
    sub = max(8, 32 // itemsize)

    block_rows = max(sub, (_TARGET_BLOCK_BYTES // (width * itemsize)) // sub * sub)
    if rows <= block_rows:
        if rows > sub:
            # Fits inside one target block: split into two blocks anyway so the
            # grid has >= 2 "parallel" steps (v7x dual-TensorCore sharding).
            block_rows = _round_up(pl.cdiv(rows, 2), sub)
        else:
            block_rows = rows  # tiny input: single full-extent block
    grid = (pl.cdiv(rows, block_rows),)

    return pl.pallas_call(
        _sigmoid_kernel,
        out_shape=jax.ShapeDtypeStruct((rows, width), out_dtype),
        grid_spec=pltpu.PrefetchScalarGridSpec(
            num_scalar_prefetch=0,
            grid=grid,
            in_specs=[pl.BlockSpec((block_rows, width), lambda i: (i, 0))],
            out_specs=pl.BlockSpec((block_rows, width), lambda i: (i, 0)),
        ),
        compiler_params=_compiler_params(),
    )(x2d)


def _sigmoid_flat(x_flat, out_dtype):
    """Kernel over a (1, n) view with a 128-multiple block; Pallas masks the
    ragged tail store, so no pad/slice HBM round trip is needed."""
    n = x_flat.shape[0]
    itemsize = jnp.dtype(x_flat.dtype).itemsize

    block_w = max(128, (_TARGET_BLOCK_BYTES // itemsize) // 128 * 128)
    if n <= block_w:
        if n > 128:
            block_w = _round_up(pl.cdiv(n, 2), 128)  # >= 2 grid steps for v7x
        else:
            block_w = n  # < 128 lanes: single full-extent (masked) block
    grid = (pl.cdiv(n, block_w),)

    out2d = pl.pallas_call(
        _sigmoid_kernel,
        out_shape=jax.ShapeDtypeStruct((1, n), out_dtype),
        grid_spec=pltpu.PrefetchScalarGridSpec(
            num_scalar_prefetch=0,
            grid=grid,
            in_specs=[pl.BlockSpec((1, block_w), lambda i: (0, i))],
            out_specs=pl.BlockSpec((1, block_w), lambda i: (0, i)),
        ),
        compiler_params=_compiler_params(),
    )(x_flat.reshape(1, n))
    return out2d.reshape(n)


def sigmoid_pallas(x):
    """Elementwise sigmoid matching torch.sigmoid(x) for any-shaped input."""
    orig_shape = x.shape
    # torch.sigmoid promotes non-float inputs to float; match that.
    out_dtype = x.dtype if jnp.issubdtype(x.dtype, jnp.floating) else jnp.float32

    n = x.size
    if n == 0:
        return jnp.zeros(orig_shape, out_dtype)

    # Fast path: widest lane-dense slab width that evenly divides the element
    # count -> no pad / no post-slice, reshape of a contiguous array is free.
    for width in (1024, 512, 256, 128):
        if n % width == 0:
            out2d = _sigmoid_rows(x.reshape(n // width, width), out_dtype)
            return out2d.reshape(orig_shape)

    # Ragged path: element count not a multiple of 128.  Stream a (1, n) view
    # with masked ragged tail -- still exactly 2N bytes of HBM traffic.
    out_flat = _sigmoid_flat(x.reshape(-1), out_dtype)
    return out_flat.reshape(orig_shape)


if __name__ == "__main__":
    key = jax.random.PRNGKey(0)

    # NCHW input, as the PyTorch module would see from a conv stack.
    x = jax.random.normal(key, (2, 4, 16, 16), dtype=jnp.float32)
    y = sigmoid_pallas(x)
    jax.block_until_ready(y)

    y_ref = jax.nn.sigmoid(x)
    assert y.shape == x.shape and y.dtype == x.dtype
    assert jnp.max(jnp.abs(y - y_ref)) < 1e-6

    # Ragged-size sanity check (exercises the in-kernel masked-tail path,
    # no pad/slice round trip).
    x2 = jax.random.normal(jax.random.PRNGKey(1), (3, 5, 7), dtype=jnp.float32)
    y2 = sigmoid_pallas(x2)
    jax.block_until_ready(y2)
    assert y2.shape == x2.shape
    assert jnp.max(jnp.abs(y2 - jax.nn.sigmoid(x2))) < 1e-6

    # Mid-size shape: exercises the forced >=2-step parallel grid split.
    x3 = jax.random.normal(jax.random.PRNGKey(2), (8, 32, 32, 32), dtype=jnp.float32)
    y3 = sigmoid_pallas(x3)
    jax.block_until_ready(y3)
    assert jnp.max(jnp.abs(y3 - jax.nn.sigmoid(x3))) < 1e-6

    print("KERNEL_OK")
</pallas_src>

<mosaic_0001>
module attributes {stable_mosaic.version = 11 : i64} {
  func.func @_sigmoid_kernel(%arg0: i32, %arg1: memref<2x1024xf32, #tpu.memory_space<vmem>>, %arg2: memref<2x1024xf32, #tpu.memory_space<vmem>>) attributes {dimension_semantics = [#tpu.dimension_semantics<parallel>], iteration_bounds = array<i64: 1>, scalar_prefetch = 0 : i64, scratch_operands = 0 : i64, tpu.core_type = #tpu.core_type<tc>, window_params = [{transform_indices = @transform_0, window_bounds = array<i64: 2, 1024>}, {transform_indices = @transform_1, window_bounds = array<i64: 2, 1024>}]} {
    %c0 = arith.constant 0 : index
    %c0_0 = arith.constant 0 : index
    %0 = vector.load %arg1[%c0, %c0_0] : memref<2x1024xf32, #tpu.memory_space<vmem>>, vector<2x1024xf32>
    %cst = arith.constant 0.000000e+00 : f32
    %1 = vector.broadcast %cst : f32 to vector<2x1024xf32>
    %2 = arith.subf %1, %0 : vector<2x1024xf32>
    %3 = math.exp %2 : vector<2x1024xf32>
    %cst_1 = arith.constant 1.000000e+00 : f32
    %4 = vector.broadcast %cst_1 : f32 to vector<2x1024xf32>
    %5 = arith.addf %4, %3 : vector<2x1024xf32>
    %6 = tpu.reciprocal %5 : vector<2x1024xf32> -> vector<2x1024xf32>
    %c0_2 = arith.constant 0 : index
    %c0_3 = arith.constant 0 : index
    %7 = vector.load %arg2[%c0_2, %c0_3] : memref<2x1024xf32, #tpu.memory_space<vmem>>, vector<2x1024xf32>
    tpu.vector_store %arg2[%c0_2, %c0_3], %6 {strides = array<i32>} : memref<2x1024xf32, #tpu.memory_space<vmem>>, vector<2x1024xf32>,
    return
  }
  func.func @transform_0(%arg0: i32) -> (i32, i32) {
    %c0_i32 = arith.constant 0 : i32
    %c0_i32_0 = arith.constant 0 : i32
    return %arg0, %c0_i32 : i32, i32
  }
  func.func @transform_1(%arg0: i32) -> (i32, i32) {
    %c0_i32 = arith.constant 0 : i32
    %c0_i32_0 = arith.constant 0 : i32
    return %arg0, %c0_i32 : i32, i32
  }
}

</mosaic_0001>

<llo_original>
// kernel: tpu_custom_call.1
$region0: #{tpu_custom_call.1}
  #allocation0 [shape = 'u32[]', space=smem, size = 0x4, offset = 0x4, fixed_abs, tag = 'smem constant byte address 0x4 - core index']
  #allocation1 [shape = 'u32[144,128]{1,0:T(1,128)}', space=vmem, size = 0x12000, scoped, tag = 'internal scratch']
  %s0 = inlined_call_operand.hbm [shape: f32[2,1024], index: 0, kind: input, shape index: {}]
  %s1 = inlined_call_operand.hbm [shape: f32[2,1024], index: 1, kind: output, shape index: {}]
  %s2 = sld [smem:[#allocation0]]
  $region18: #{tpu_custom_call.1} parent=0
    _
  %s4 = ssub.s32 1, %s2
  %s5 = scalar_select 0, %s4, %s2
  $region1: #{tpu_custom_call.1} parent=0
    #allocation2 [shape = 'u8[8192]{0}', space=vmem, size = 0x2000, scoped, tag = 'input window, operand 0, single buffered']
    #allocation3 [shape = 's32[1]{0}', space=sflag, size = 0x4, scoped, tag = 'scoped memory for tpu_custom_call.1']
    #allocation4 [shape = 's32[1]{0}', space=sflag, size = 0x4, scoped, tag = 'scoped memory for tpu_custom_call.1']
    #allocation5 [shape = 'u8[8192]{0}', space=vmem, size = 0x2000, scoped, tag = 'output window, operand 0, single buffered']
    %6 = vsyncpa [#allocation3], 0
    %7 = vsyncpa [#allocation4], 0
    // Predicated region
    $region2: #{tpu_custom_call.1} parent=1 // pred_check
      _
    $region3: #{tpu_custom_call.1} parent=1 // pred_check_branch
      %9 = sbr.rel (0) target = $region5
    $region4: #{tpu_custom_call.1} parent=1 // pred_region
      %s11 = ssub.s32 256, 256
      %12 = vsyncadd [#allocation3], %s11
      %s14 = sshll.u32 [#allocation2], 4
      %s15 = int_to_ptr.vmem [resolvable:$true] %s14
      %17 = dma.hbm_to_vmem [thread:$0]  %s0, 256, %s15, [#allocation3]
    $region5: #{tpu_custom_call.1} parent=1 // pred_fallthru
      _
    // Predicated region
    $region6: #{tpu_custom_call.1} parent=1 // pred_check
      _
    $region7: #{tpu_custom_call.1} parent=1 // pred_check_branch
      %19 = sbr.rel (0) target = $region9
    $region8: #{tpu_custom_call.1} parent=1 // pred_region
      %20 = dma.done [#allocation3], 256
    $region9: #{tpu_custom_call.1} parent=1 // pred_fallthru
      _
    %v21 = vld [vmem:[#allocation2] sm:$0xff]
    %v22 = vld [vmem:[#allocation2 + $0x8] sm:$0xff]
    %v23 = vsub.f32 0.0, %v21
    %v24 = vsub.f32 0.0, %v22
    %v25 = vmul.f32 %v23, 1.442695
    %v26 = vpow.pop %v25
    %v27 = vmul.f32 %v24, 1.442695
    %v28 = vpow.pop %v27
    %v29 = vadd.f32 %v26, 1.0
    %v30 = vadd.f32 %v28, 1.0
    %v31 = vrcp.pop %v29
    %v32 = vrcp.pop %v30
    %33 = vst [vmem:[#allocation5] sm:$0xff] %v31
    %34 = vst [vmem:[#allocation5 + $0x8] sm:$0xff] %v32
    // Predicated region
    $region10: #{tpu_custom_call.1} parent=1 // pred_check
      _
    $region11: #{tpu_custom_call.1} parent=1 // pred_check_branch
      %36 = sbr.rel (0) target = $region13
    $region12: #{tpu_custom_call.1} parent=1 // pred_region
      %s38 = ssub.s32 256, 256
      %39 = vsyncadd [#allocation4], %s38
      %s41 = sshll.u32 [#allocation5], 4
      %s42 = int_to_ptr.vmem [resolvable:$true] %s41
      %44 = dma.vmem_to_hbm [thread:$0]  %s42, 256, %s1, [#allocation4]
    $region13: #{tpu_custom_call.1} parent=1 // pred_fallthru
      _
    // Predicated region
    $region14: #{tpu_custom_call.1} parent=1 // pred_check
      _
    $region15: #{tpu_custom_call.1} parent=1 // pred_check_branch
      %46 = sbr.rel (0) target = $region17
    $region16: #{tpu_custom_call.1} parent=1 // pred_region
      %47 = dma.done [#allocation4], 256
    $region17: #{tpu_custom_call.1} parent=1 // pred_fallthru
      _
    %48 = vsyncpa [#allocation3], 1
    %49 = vsyncpa [#allocation4], 1

</llo_original>
